<compile_context>
chip_gen: v5e
topology: v5e:2x2
jax: 0.10.0
libtpu: 0.0.40
codegen_flags: <defaults>
</compile_context>

<pallas_src>
import functools

import jax
import jax.numpy as jnp
from jax.experimental import pallas as pl
from jax.experimental.pallas import tpu as pltpu

IN_FEATURES = 93
HIDDEN = 64
OUT_FEATURES = 1


def _round_up(x, m):
    return ((x + m - 1) // m) * m


def _mlp_kernel(x_ref, w1_ref, b1_ref, w2_ref, b2_ref, o_ref):
    # Layer 1: bf16 MXU matmul with f32 accumulation; bias + ReLU on the VPU
    # in f32 so the elementwise math matches the PyTorch module closely.
    h = jnp.dot(x_ref[...], w1_ref[...], preferred_element_type=jnp.float32)
    h = jnp.maximum(h + b1_ref[...], 0.0)                       # (TB, 64) f32
    # Layer 2: N=1 matmul, also on the MXU (bf16 single pass, f32 accumulate)
    # instead of a VPU multiply + XLU lane reduce — keeps the shared
    # vector-extended slot free of XLU reduction work.
    y = jnp.dot(h.astype(jnp.bfloat16), w2_ref[...],
                preferred_element_type=jnp.float32)             # (TB, 1) f32
    o_ref[...] = jnp.maximum(y + b2_ref[0, 0], 0.0).astype(o_ref.dtype)


@functools.partial(jax.jit, static_argnames=("block_batch",))
def nn_forward(x, w1, b1, w2, b2, *, block_batch=16384):
    """x: (B, 93) float -> (B, 1) f32, matching NN.forward semantics."""
    B = x.shape[0]
    # Pad the batch only to the sublane multiple (8); ragged tails are handled
    # by a short final tile via pl.cdiv instead of padding up to block_batch.
    b_pad = _round_up(B, 8)
    tb = min(block_batch, b_pad)          # both multiples of 8
    if b_pad != B:
        x = jnp.pad(x, ((0, b_pad - B), (0, 0)))   # zero rows, sliced off below

    # bf16 activations / weights, f32 everything after the MXU.
    x_bf = x.astype(jnp.bfloat16)
    w1_bf = w1.astype(jnp.bfloat16)
    b1_row = b1.reshape(1, HIDDEN).astype(jnp.float32)
    w2_bf = w2.reshape(HIDDEN, OUT_FEATURES).astype(jnp.bfloat16)
    b2_s = b2.reshape(1, 1).astype(jnp.float32)

    grid = (pl.cdiv(b_pad, tb),)
    flops = 2 * b_pad * (IN_FEATURES * HIDDEN + HIDDEN * OUT_FEATURES) \
        + 2 * b_pad * HIDDEN + 2 * b_pad
    bytes_accessed = (
        b_pad * IN_FEATURES * 2            # x (bf16)
        + b_pad * OUT_FEATURES * 4         # out (f32)
        + IN_FEATURES * HIDDEN * 2         # w1 (bf16)
        + HIDDEN * 4 + HIDDEN * 2 + 4      # b1, w2, b2
    )

    out = pl.pallas_call(
        _mlp_kernel,
        out_shape=jax.ShapeDtypeStruct((b_pad, OUT_FEATURES), jnp.float32),
        grid=grid,
        in_specs=[
            # Batch-tiled input: tile i+1 is prefetched while computing tile i.
            pl.BlockSpec((tb, IN_FEATURES), lambda i: (i, 0)),
            # Weights / biases: fixed block index -> VMEM-resident, DMA'd once.
            pl.BlockSpec((IN_FEATURES, HIDDEN), lambda i: (0, 0)),
            pl.BlockSpec((1, HIDDEN), lambda i: (0, 0)),
            pl.BlockSpec((HIDDEN, OUT_FEATURES), lambda i: (0, 0)),
            # Second bias is a single scalar -> SMEM.
            pl.BlockSpec(memory_space=pltpu.MemorySpace.SMEM),
        ],
        out_specs=pl.BlockSpec((tb, OUT_FEATURES), lambda i: (i, 0)),
        compiler_params=pltpu.CompilerParams(
            dimension_semantics=("parallel",),     # shard batch tiles across TCs
            vmem_limit_bytes=32 * 1024 * 1024,     # covers v5e's 16 MiB default
        ),
        cost_estimate=pl.CostEstimate(
            flops=flops, transcendentals=0, bytes_accessed=bytes_accessed),
    )(x_bf, w1_bf, b1_row, w2_bf, b2_s)
    return out[:B]


def init_params(key):
    """Deterministic init mimicking torch.nn.Linear defaults (uniform ±1/sqrt(fan_in))."""
    k1, k2, k3, k4 = jax.random.split(key, 4)
    bound1 = 1.0 / jnp.sqrt(93.0)
    bound2 = 1.0 / jnp.sqrt(64.0)
    w1 = jax.random.uniform(k1, (IN_FEATURES, HIDDEN), jnp.float32, -bound1, bound1)
    b1 = jax.random.uniform(k2, (1, HIDDEN), jnp.float32, -bound1, bound1)
    w2 = jax.random.uniform(k3, (HIDDEN, OUT_FEATURES), jnp.float32, -bound2, bound2)
    b2 = jax.random.uniform(k4, (1, 1), jnp.float32, -bound2, bound2)
    return w1, b1, w2, b2


def _reference(x, w1, b1, w2, b2):
    """Mirrors the kernel's bf16-input / f32-accumulate numerics."""
    xb = x.astype(jnp.bfloat16).astype(jnp.float32)
    w1b = w1.astype(jnp.bfloat16).astype(jnp.float32)
    h = jnp.maximum(xb @ w1b + b1.reshape(1, HIDDEN), 0.0)
    hb = h.astype(jnp.bfloat16).astype(jnp.float32)
    w2b = w2.reshape(HIDDEN, OUT_FEATURES).astype(jnp.bfloat16).astype(jnp.float32)
    return jnp.maximum(hb @ w2b + b2.reshape(1, 1), 0.0)


if __name__ == "__main__":
    key = jax.random.PRNGKey(0)
    kx, kx2, kx3, kp = jax.random.split(key, 4)
    w1, b1, w2, b2 = init_params(kp)

    # Small, sublane-aligned case (single tile).
    batch = 8
    x = jax.random.normal(kx, (batch, IN_FEATURES), jnp.float32)
    out = jax.block_until_ready(nn_forward(x, w1, b1, w2, b2))
    ref = _reference(x, w1, b1, w2, b2)
    assert out.shape == (batch, 1)
    assert jnp.allclose(out, ref, atol=5e-3, rtol=5e-3)

    # Ragged batch (exercises the pad-to-multiple-of-8 tail path).
    batch2 = 30
    x2 = jax.random.normal(kx2, (batch2, IN_FEATURES), jnp.float32)
    out2 = jax.block_until_ready(nn_forward(x2, w1, b1, w2, b2))
    ref2 = _reference(x2, w1, b1, w2, b2)
    assert out2.shape == (batch2, 1)
    assert jnp.allclose(out2, ref2, atol=5e-3, rtol=5e-3)

    # Multi-tile grid with a short final tile (exercises pl.cdiv partial block).
    batch3 = 300
    x3 = jax.random.normal(kx3, (batch3, IN_FEATURES), jnp.float32)
    out3 = jax.block_until_ready(nn_forward(x3, w1, b1, w2, b2, block_batch=128))
    ref3 = _reference(x3, w1, b1, w2, b2)
    assert out3.shape == (batch3, 1)
    assert jnp.allclose(out3, ref3, atol=5e-3, rtol=5e-3)

    print("KERNEL_OK")
</pallas_src>

<mosaic_0001>
module attributes {stable_mosaic.version = 11 : i64} {
  func.func @_mlp_kernel(%arg0: i32, %arg1: memref<8x93xbf16, #tpu.memory_space<vmem>>, %arg2: memref<93x64xbf16, #tpu.memory_space<vmem>>, %arg3: memref<1x64xf32, #tpu.memory_space<vmem>>, %arg4: memref<64x1xbf16, #tpu.memory_space<vmem>>, %arg5: memref<1x1xf32, #tpu.memory_space<smem>>, %arg6: memref<8x1xf32, #tpu.memory_space<vmem>>) attributes {dimension_semantics = [#tpu.dimension_semantics<parallel>], iteration_bounds = array<i64: 1>, scalar_prefetch = 0 : i64, scratch_operands = 0 : i64, tpu.core_type = #tpu.core_type<tc>, window_params = [{transform_indices = @transform_0, window_bounds = array<i64: 8, 93>}, {pipeline_mode = #tpu.pipeline_mode<synchronous>, transform_indices = @transform_1, window_bounds = array<i64: 93, 64>}, {pipeline_mode = #tpu.pipeline_mode<synchronous>, transform_indices = @transform_2, window_bounds = array<i64: 1, 64>}, {pipeline_mode = #tpu.pipeline_mode<synchronous>, transform_indices = @transform_3, window_bounds = array<i64: 64, 1>}, {transform_indices = @transform_4, window_bounds = array<i64: 1, 1>}, {transform_indices = @transform_5, window_bounds = array<i64: 8, 1>}]} {
    %c0 = arith.constant 0 : index
    %c0_0 = arith.constant 0 : index
    %0 = vector.load %arg1[%c0, %c0_0] : memref<8x93xbf16, #tpu.memory_space<vmem>>, vector<8x93xbf16>
    %c0_1 = arith.constant 0 : index
    %c0_2 = arith.constant 0 : index
    %1 = vector.load %arg2[%c0_1, %c0_2] : memref<93x64xbf16, #tpu.memory_space<vmem>>, vector<93x64xbf16>
    %cst = arith.constant dense<0.000000e+00> : vector<8x64xf32>
    %2 = tpu.matmul %0, %1, %cst {dimension_numbers = #tpu.dot_dimension_numbers<[1], [0], [0], [1], [0, 0, 1, 1], [], []>} : vector<8x93xbf16>, vector<93x64xbf16>, vector<8x64xf32> -> vector<8x64xf32>
    %c0_3 = arith.constant 0 : index
    %c0_4 = arith.constant 0 : index
    %3 = vector.load %arg3[%c0_3, %c0_4] : memref<1x64xf32, #tpu.memory_space<vmem>>, vector<1x64xf32>
    %4 = vector.broadcast %3 : vector<1x64xf32> to vector<8x64xf32>
    %5 = arith.addf %2, %4 : vector<8x64xf32>
    %cst_5 = arith.constant 0.000000e+00 : f32
    %6 = vector.broadcast %cst_5 : f32 to vector<8x64xf32>
    %7 = arith.maximumf %5, %6 : vector<8x64xf32>
    %8 = arith.truncf %7 : vector<8x64xf32> to vector<8x64xbf16>
    %c0_6 = arith.constant 0 : index
    %c0_7 = arith.constant 0 : index
    %9 = vector.load %arg4[%c0_6, %c0_7] : memref<64x1xbf16, #tpu.memory_space<vmem>>, vector<64x1xbf16>
    %cst_8 = arith.constant dense<0.000000e+00> : vector<8x1xf32>
    %10 = tpu.matmul %8, %9, %cst_8 {dimension_numbers = #tpu.dot_dimension_numbers<[1], [0], [0], [1], [0, 0, 1, 1], [], []>} : vector<8x64xbf16>, vector<64x1xbf16>, vector<8x1xf32> -> vector<8x1xf32>
    %c0_9 = arith.constant 0 : index
    %c0_10 = arith.constant 0 : index
    %11 = memref.load %arg5[%c0_9, %c0_10] : memref<1x1xf32, #tpu.memory_space<smem>>
    %12 = vector.broadcast %11 : f32 to vector<8x1xf32>
    %13 = arith.addf %10, %12 : vector<8x1xf32>
    %cst_11 = arith.constant 0.000000e+00 : f32
    %14 = vector.broadcast %cst_11 : f32 to vector<8x1xf32>
    %15 = arith.maximumf %13, %14 : vector<8x1xf32>
    %c0_12 = arith.constant 0 : index
    %c0_13 = arith.constant 0 : index
    %16 = vector.load %arg6[%c0_12, %c0_13] : memref<8x1xf32, #tpu.memory_space<vmem>>, vector<8x1xf32>
    tpu.vector_store %arg6[%c0_12, %c0_13], %15 {strides = array<i32>} : memref<8x1xf32, #tpu.memory_space<vmem>>, vector<8x1xf32>,
    return
  }
  func.func @transform_0(%arg0: i32) -> (i32, i32) {
    %c0_i32 = arith.constant 0 : i32
    %c0_i32_0 = arith.constant 0 : i32
    return %arg0, %c0_i32 : i32, i32
  }
  func.func @transform_1(%arg0: i32) -> (i32, i32) {
    %c0_i32 = arith.constant 0 : i32
    %c0_i32_0 = arith.constant 0 : i32
    %c0_i32_1 = arith.constant 0 : i32
    return %c0_i32, %c0_i32_0 : i32, i32
  }
  func.func @transform_2(%arg0: i32) -> (i32, i32) {
    %c0_i32 = arith.constant 0 : i32
    %c0_i32_0 = arith.constant 0 : i32
    %c0_i32_1 = arith.constant 0 : i32
    return %c0_i32, %c0_i32_0 : i32, i32
  }
  func.func @transform_3(%arg0: i32) -> (i32, i32) {
    %c0_i32 = arith.constant 0 : i32
    %c0_i32_0 = arith.constant 0 : i32
    %c0_i32_1 = arith.constant 0 : i32
    return %c0_i32, %c0_i32_0 : i32, i32
  }
  func.func @transform_4(%arg0: i32) -> (i32, i32) {
    %c0_i32 = arith.constant 0 : i32
    %c0_i32_0 = arith.constant 0 : i32
    %c0_i32_1 = arith.constant 0 : i32
    return %c0_i32, %c0_i32_0 : i32, i32
  }
  func.func @transform_5(%arg0: i32) -> (i32, i32) {
    %c0_i32 = arith.constant 0 : i32
    %c0_i32_0 = arith.constant 0 : i32
    return %arg0, %c0_i32 : i32, i32
  }
}

</mosaic_0001>

<llo_original>
// kernel: nn_forward.1
$region0: #{nn_forward.1}
  #allocation0 [shape = 'u32[]', space=smem, size = 0x4, offset = 0x4, fixed_abs, tag = 'smem constant byte address 0x4 - core index']
  #allocation1 [shape = 'u32[72,128]{1,0:T(1,128)}', space=vmem, size = 0x9000, scoped, tag = 'internal scratch']
  #allocation2 [shape = 'f32[1,1]{1,0:T(1,128)S(6)}', space=smem, size = 0x200, scoped, tag = 'scoped memory for nn_forward.1']
  %s0 = inlined_call_operand.vmem [shape: bf16[8,93], index: 0, kind: input, shape index: {}]
  %s1 = inlined_call_operand.vmem [shape: bf16[93,64], index: 1, kind: input, shape index: {}]
  %s2 = inlined_call_operand.vmem [shape: f32[1,64], index: 2, kind: input, shape index: {}]
  %s3 = inlined_call_operand.vmem [shape: bf16[64,1], index: 3, kind: input, shape index: {}]
  %s4 = inlined_call_operand.<no memory space> [shape: f32[1,1], index: 4, kind: input, shape index: {}]
  %s5 = inlined_call_operand.vmem [shape: f32[8,1], index: 5, kind: output, shape index: {}]
  %s6 = sld [smem:[#allocation0]]
  $region30: #{nn_forward.1} parent=0
    _
  %s8 = ssub.s32 1, %s6
  %s9 = scalar_select 0, %s8, %s6
  %10 = sst [smem:[#allocation2]] %s4
  // Predicated region
  $region2: #{nn_forward.1} parent=0 // pred_check
    _
  $region3: #{nn_forward.1} parent=0 // pred_check_branch
    %12 = sbr.rel (0) target = $region5
  $region4: #{nn_forward.1} parent=0 // pred_region
    _
  $region5: #{nn_forward.1} parent=0 // pred_fallthru
    _
  // Predicated region
  $region6: #{nn_forward.1} parent=0 // pred_check
    _
  $region7: #{nn_forward.1} parent=0 // pred_check_branch
    %14 = sbr.rel (0) target = $region9
  $region8: #{nn_forward.1} parent=0 // pred_region
    _
  $region9: #{nn_forward.1} parent=0 // pred_fallthru
    _
  // Predicated region
  $region10: #{nn_forward.1} parent=0 // pred_check
    _
  $region11: #{nn_forward.1} parent=0 // pred_check_branch
    %16 = sbr.rel (0) target = $region13
  $region12: #{nn_forward.1} parent=0 // pred_region
    _
  $region13: #{nn_forward.1} parent=0 // pred_fallthru
    _
  // Predicated region
  $region14: #{nn_forward.1} parent=0 // pred_check
    _
  $region15: #{nn_forward.1} parent=0 // pred_check_branch
    %18 = sbr.rel (0) target = $region17
  $region16: #{nn_forward.1} parent=0 // pred_region
    _
  $region17: #{nn_forward.1} parent=0 // pred_fallthru
    _
  // Predicated region
  $region18: #{nn_forward.1} parent=0 // pred_check
    _
  $region19: #{nn_forward.1} parent=0 // pred_check_branch
    %20 = sbr.rel (0) target = $region21
  $region20: #{nn_forward.1} parent=0 // pred_region
    _
  $region21: #{nn_forward.1} parent=0 // pred_fallthru
    _
  %v22 = vld [vmem:[%s0] sm:$0xf]
  %v23 = vld [vmem:[%s1] sm:$0xf]
  %v24 = vld [vmem:[%s1 + $0x4] sm:$0xf]
  %v25 = vld [vmem:[%s1 + $0x8] sm:$0xf]
  %v26 = vld [vmem:[%s1 + $0xc] sm:$0xf]
  %v27 = vld [vmem:[%s1 + $0x10] sm:$0xf]
  %v28 = vld [vmem:[%s1 + $0x14] sm:$0xf]
  %v29 = vld [vmem:[%s1 + $0x18] sm:$0xf]
  %v30 = vld [vmem:[%s1 + $0x1c] sm:$0xf]
  %v31 = vld [vmem:[%s1 + $0x20] sm:$0xf]
  %v32 = vld [vmem:[%s1 + $0x24] sm:$0xf]
  %v33 = vld [vmem:[%s1 + $0x28] sm:$0xf]
  %v34 = vld [vmem:[%s1 + $0x2c] sm:$0x7]
  %v35 = vld [vmem:[%s2] sm:$0x1]
  %v37 = vperm.slane %v35, 0
  %v51 = vunpack.c.l.b16 %v23
  %v52 = vunpack.c.l.b16 %v24
  %v53 = vunpack.c.l.b16 %v25
  %v54 = vunpack.c.l.b16 %v26
  %v55 = vunpack.c.l.b16 %v27
  %v56 = vunpack.c.l.b16 %v28
  %v57 = vunpack.c.l.b16 %v29
  %v58 = vunpack.c.l.b16 %v30
  %v59 = vunpack.c.l.b16 %v31
  %v60 = vunpack.c.l.b16 %v32
  %v61 = vunpack.c.l.b16 %v33
  %v62 = vunpack.c.l.b16 %v34
  %v63 = vpack.c.b16 %v52, %v51
  %v64 = vpack.c.b16 %v54, %v53
  %v65 = vpack.c.b16 %v56, %v55
  %v66 = vpack.c.b16 %v58, %v57
  %v67 = vpack.c.b16 %v60, %v59
  %v68 = vpack.c.b16 %v62, %v61
  %vm74 = vcmask 760832
  %v76 = vsel %vm74, %v22, 0
  %vm78 = vcmask 1045504
  %vm79 = vcmask 1046528
  %v80 = vsel %vm78, 4294967295, 65535
  %v81 = vsel %vm79, %v80, 0
  %v83 = vand.u32 %v68, %v81
  %85 = vmatpush.bf16.msra.mxu0 0
  %86 = vmatpush.bf16.msra.mxu0 0
  %87 = vmatpush.bf16.msra.mxu0 %v83
  %88 = vmatpush.bf16.msra.mxu0 %v67
  %89 = vmatpush.bf16.msra.mxu0 %v66
  %90 = vmatpush.bf16.msra.mxu0 %v65
  %91 = vmatpush.bf16.msra.mxu0 %v64
  %92 = vmatpush.bf16.msra.mxu0 %v63
  %93 = vmatmul.bf16.gmra.mxu0 %v76
  %v94 = vpop.f32.mrf.mxu0
  %v95 = vadd.f32 %v37, %v94
  %v96 = vpop.f32.mrf.mxu0
  %97 = vdwg.mxu0
  %v98 = vmax.f32 %v95, 0.0
  %v99 = vpack.c.bf16 %v98, %v98
  %v100 = vld [vmem:[%s3] sm:$0xf]
  %v101 = vld [vmem:[%s3 + $0x4] sm:$0xf]
  %v102 = vld [vmem:[%s3 + $0x8] sm:$0xf]
  %v103 = vld [vmem:[%s3 + $0xc] sm:$0xf]
  %v104 = vld [vmem:[%s3 + $0x10] sm:$0xf]
  %v105 = vld [vmem:[%s3 + $0x14] sm:$0xf]
  %v106 = vld [vmem:[%s3 + $0x18] sm:$0xf]
  %v107 = vld [vmem:[%s3 + $0x1c] sm:$0xf]
  %s108 = sld [smem:[#allocation2]]
  %v109 = vstv %s108
  %v118 = vunpack.c.l.b16 %v100
  %v119 = vunpack.c.l.b16 %v101
  %v120 = vunpack.c.l.b16 %v102
  %v121 = vunpack.c.l.b16 %v103
  %v122 = vunpack.c.l.b16 %v104
  %v123 = vunpack.c.l.b16 %v105
  %v124 = vunpack.c.l.b16 %v106
  %v125 = vunpack.c.l.b16 %v107
  %v126 = vpack.c.b16 %v119, %v118
  %v127 = vpack.c.b16 %v121, %v120
  %v128 = vpack.c.b16 %v123, %v122
  %v129 = vpack.c.b16 %v125, %v124
  %vm134 = vcmask 523264
  %v136 = vsel %vm134, %v99, 0
  %138 = vmatpush.bf16.msra.mxu0 0
  %139 = vmatpush.bf16.msra.mxu0 0
  %140 = vmatpush.bf16.msra.mxu0 0
  %141 = vmatpush.bf16.msra.mxu0 0
  %142 = vmatpush.bf16.msra.mxu0 %v129
  %143 = vmatpush.bf16.msra.mxu0 %v128
  %144 = vmatpush.bf16.msra.mxu0 %v127
  %145 = vmatpush.bf16.msra.mxu0 %v126
  %146 = vmatmul.bf16.gmra.mxu0 %v136
  %v147 = vpop.f32.mrf.mxu0
  %v148 = vadd.f32 %v109, %v147
  %v149 = vpop.f32.mrf.mxu0
  %150 = vdwg.mxu0
  %v151 = vmax.f32 %v148, 0.0
  %vm152 = vcmask 7168
  %153 = vst.msk [vmem:[%s5] sm:$0xff] %vm152, %v151
  // Predicated region
  $region22: #{nn_forward.1} parent=0 // pred_check
    _
  $region23: #{nn_forward.1} parent=0 // pred_check_branch
    %155 = sbr.rel (0) target = $region25
  $region24: #{nn_forward.1} parent=0 // pred_region
    _
  $region25: #{nn_forward.1} parent=0 // pred_fallthru
    _
  // Predicated region
  $region26: #{nn_forward.1} parent=0 // pred_check
    _
  $region27: #{nn_forward.1} parent=0 // pred_check_branch
    %157 = sbr.rel (0) target = $region29
  $region28: #{nn_forward.1} parent=0 // pred_region
    _
  $region29: #{nn_forward.1} parent=0 // pred_fallthru
    _

</llo_original>
